<compile_context>
chip_gen: v7x
topology: tpu7x:2x2x1
jax: 0.10.0
libtpu: 0.0.40
codegen_flags: <defaults>
</compile_context>

<pallas_src>
import functools

import jax
import jax.numpy as jnp
from jax import lax
from jax.experimental import pallas as pl
from jax.experimental.pallas import tpu as pltpu


def _gate_kernel(x_ref, w_ref, within_ref, pidx_ref, o_ref, *, k, n_patches, pp):
    """One (Bt, C, HW) batch block per grid step.

    x_ref      : (Bt, C, HWp)  NCHW input block, spatial dims flattened (lane-dense)
    w_ref      : (C, PP)       fused gating weight (w2 . w1), flattened over (ph, pw)
    within_ref : (1, HWp)      int32 within-patch position of each pixel
    pidx_ref   : (1, HWp)      int32 patch index of each pixel
    o_ref      : (Bt, C, HWp)  gated output (input * per-patch gate)
    """
    x = x_ref[...]
    xf = x.astype(jnp.float32)                                   # force f32 accumulation
    hw = x.shape[-1]
    n = n_patches

    # Rebuild the tiny indicator matrices in VMEM from the per-pixel index maps
    # (iota-compares on the VPU; no (C,HW)/(HW,N) constants ever touch HBM).
    within = within_ref[...]                                     # (1, HWp) int32
    pidx = pidx_ref[...]                                         # (1, HWp) int32
    t_ind = (lax.broadcasted_iota(jnp.int32, (pp, hw), 0) == within).astype(jnp.float32)
    poolT = (lax.broadcasted_iota(jnp.int32, (n, hw), 0) == pidx).astype(jnp.float32)

    # Fused conv1(stride=P, pad=0) + conv2(1x1): tile the (C, P*P) weight over
    # the pixel grid with one small matmul, one VPU multiply + channel reduce,
    # then pool pixels into patches (contract HW against poolT's HW axis).
    wtile = jnp.dot(w_ref[...], t_ind, preferred_element_type=jnp.float32)   # (C, HWp)
    zc = jnp.sum(xf * wtile[None, :, :], axis=1)                             # (Bt, HWp)
    s = lax.dot_general(zc, poolT, (((1,), (1,)), ((), ())),
                        preferred_element_type=jnp.float32)                  # (Bt, N)

    # torch.topk + scatter_add == keep the top-k patch scores, zero the rest.
    # k passes of running max; ties broken toward the smaller patch index
    # (matches lax.top_k / torch.topk on finite scores).
    idx = lax.broadcasted_iota(jnp.int32, s.shape, 1)

    def body(_, carry):
        work, selected = carry                                               # (Bt, N) each
        m = jnp.max(work, axis=1, keepdims=True)                             # (Bt, 1)
        first = jnp.min(jnp.where(work == m, idx, n), axis=1, keepdims=True)
        pick = idx == first                                                  # (Bt, N) bool
        work = jnp.where(pick, -jnp.inf, work)
        selected = jnp.maximum(selected, pick.astype(jnp.float32))
        return work, selected

    _, selected = lax.fori_loop(0, k, body, (s, jnp.zeros_like(s)), unroll=True)
    gate = s * selected                                                      # (Bt, N)

    # repeat_interleave over space (patch -> pixels) == matmul with poolT;
    # repeat over channels == the sublane broadcast in the final multiply.
    gmap = jnp.dot(gate, poolT, preferred_element_type=jnp.float32)          # (Bt, HWp)
    o_ref[...] = (xf * gmap[:, None, :]).astype(o_ref.dtype)


def gate_forward(x, gating_kernel_1, gating_kernel_2, *, k, patch_size):
    """x: (B, C, H, W) NCHW, same convention as the PyTorch module."""
    B, C, H, W = x.shape
    P = patch_size
    assert H % P == 0 and W % P == 0
    Hp, Wp = H // P, W // P
    N = Hp * Wp
    PP = P * P
    HW = H * W
    assert 1 <= k <= N

    # Fuse the two convs (valid while gating_activation is None):
    # wf[c, ph, pw] = sum_m w2[0, m] * w1[m, c, ph, pw].
    wf = jnp.einsum("m,mcpq->cpq", gating_kernel_2.reshape(-1), gating_kernel_1)
    wf2 = wf.reshape(C, PP).astype(jnp.float32)

    # Per-pixel (flattened spatial index) within-patch position / patch index.
    hh = jnp.arange(H, dtype=jnp.int32)
    ww = jnp.arange(W, dtype=jnp.int32)
    within = ((hh % P)[:, None] * P + (ww % P)[None, :]).reshape(1, HW)
    pidx = ((hh // P)[:, None] * Wp + (ww // P)[None, :]).reshape(1, HW)

    # Free reshape (no transpose) + pad the lane dim to a multiple of 128 so
    # output stores are unmasked.  Padded pixels map to out-of-range indices,
    # so they never match any indicator row and contribute nothing.
    HWp = ((HW + 127) // 128) * 128
    x3 = x.reshape(B, C, HW)
    if HWp != HW:
        pad = HWp - HW
        x3 = jnp.pad(x3, ((0, 0), (0, 0), (0, pad)))
        within = jnp.pad(within, ((0, 0), (0, pad)), constant_values=PP)
        pidx = jnp.pad(pidx, ((0, 0), (0, pad)), constant_values=N)

    # Batch blocking: ~1 MB blocks to amortize per-step overhead, but keep
    # >= 2 grid steps when B > 1 so v7x's two TensorCores both get work.
    itemsize = jnp.dtype(x.dtype).itemsize
    per_sample_bytes = C * HWp * itemsize
    target_block_bytes = 1 << 20
    divisors = [d for d in range(1, B + 1) if B % d == 0]
    fitting = [d for d in divisors if d * per_sample_bytes <= target_block_bytes] or [1]
    Bt = max(fitting)
    if B > 1 and B // Bt < 2:
        Bt = max(d for d in divisors if d <= max(1, B // 2))

    block_bytes = Bt * C * HWp * itemsize
    const_bytes = (C * PP + 2 * HWp) * 4
    # in + out double-buffered, constants, plus in-kernel f32 temporaries.
    vmem_limit = int(min(64 * 1024 * 1024,
                         max(32 * 1024 * 1024, 8 * block_bytes + 4 * const_bytes)))

    kernel = functools.partial(_gate_kernel, k=k, n_patches=N, pp=PP)
    out3 = pl.pallas_call(
        kernel,
        out_shape=jax.ShapeDtypeStruct((B, C, HWp), x.dtype),
        grid_spec=pltpu.PrefetchScalarGridSpec(
            num_scalar_prefetch=0,
            grid=(B // Bt,),
            in_specs=[
                pl.BlockSpec((Bt, C, HWp), lambda b: (b, 0, 0)),
                pl.BlockSpec((C, PP), lambda b: (0, 0)),
                pl.BlockSpec((1, HWp), lambda b: (0, 0)),
                pl.BlockSpec((1, HWp), lambda b: (0, 0)),
            ],
            out_specs=pl.BlockSpec((Bt, C, HWp), lambda b: (b, 0, 0)),
        ),
        compiler_params=pltpu.CompilerParams(
            dimension_semantics=("parallel",),
            vmem_limit_bytes=vmem_limit,
        ),
    )(x3, wf2, within, pidx)

    if HWp != HW:
        out3 = out3[:, :, :HW]
    return out3.reshape(B, C, H, W)


def _reference(x, w1, w2, k, P):
    """Pure-JAX reference mirroring the PyTorch forward."""
    dn = ("NCHW", "OIHW", "NCHW")
    g1 = lax.conv_general_dilated(x, w1, (P, P), "VALID", dimension_numbers=dn)
    g2 = lax.conv_general_dilated(g1, w2, (1, 1), "VALID", dimension_numbers=dn)
    b, c, h, w = g2.shape
    flat = g2.reshape(b, c, h * w)
    vals, idx = lax.top_k(flat, k)
    bi = jnp.arange(b)[:, None, None]
    ci = jnp.arange(c)[None, :, None]
    ret = jnp.zeros((b, c, h * w), flat.dtype).at[bi, ci, idx].add(vals)
    gate = ret.reshape(b, c, h, w)
    gate = jnp.repeat(gate, P, axis=2)
    gate = jnp.repeat(gate, P, axis=3)
    gate = jnp.repeat(gate, x.shape[1], axis=1)
    return x * gate


if __name__ == "__main__":
    key = jax.random.PRNGKey(0)
    B, C, H, W = 2, 4, 16, 16
    P = 4          # patch_size
    k = 3          # top-k patches kept per batch element

    kx, k1, k2 = jax.random.split(key, 3)
    x = jax.random.normal(kx, (B, C, H, W), jnp.float32)
    # nn.init.normal_(..., mean=0.0, std=0.0001)
    gating_kernel_1 = 1e-4 * jax.random.normal(k1, (C // 2, C, P, P), jnp.float32)
    gating_kernel_2 = 1e-4 * jax.random.normal(k2, (1, C // 2, 1, 1), jnp.float32)

    out = gate_forward(x, gating_kernel_1, gating_kernel_2, k=k, patch_size=P)
    out = jax.block_until_ready(out)

    ref = _reference(x, gating_kernel_1, gating_kernel_2, k, P)
    assert out.shape == (B, C, H, W) and out.dtype == jnp.float32
    assert jnp.allclose(out, ref, rtol=1e-4, atol=1e-11), "mismatch vs reference"

    print("KERNEL_OK")
</pallas_src>

<mosaic_0001>
module attributes {stable_mosaic.version = 11 : i64} {
  func.func @_gate_kernel(%arg0: i32, %arg1: memref<1x4x256xf32, #tpu.memory_space<vmem>>, %arg2: memref<4x16xf32, #tpu.memory_space<vmem>>, %arg3: memref<1x256xi32, #tpu.memory_space<vmem>>, %arg4: memref<1x256xi32, #tpu.memory_space<vmem>>, %arg5: memref<1x4x256xf32, #tpu.memory_space<vmem>>) attributes {dimension_semantics = [#tpu.dimension_semantics<parallel>], iteration_bounds = array<i64: 2>, scalar_prefetch = 0 : i64, scratch_operands = 0 : i64, tpu.core_type = #tpu.core_type<tc>, window_params = [{transform_indices = @transform_0, window_bounds = array<i64: 1, 4, 256>}, {pipeline_mode = #tpu.pipeline_mode<synchronous>, transform_indices = @transform_1, window_bounds = array<i64: 4, 16>}, {pipeline_mode = #tpu.pipeline_mode<synchronous>, transform_indices = @transform_2, window_bounds = array<i64: 1, 256>}, {pipeline_mode = #tpu.pipeline_mode<synchronous>, transform_indices = @transform_3, window_bounds = array<i64: 1, 256>}, {transform_indices = @transform_4, window_bounds = array<i64: 1, 4, 256>}]} {
    %c0 = arith.constant 0 : index
    %c0_0 = arith.constant 0 : index
    %c0_1 = arith.constant 0 : index
    %0 = vector.load %arg1[%c0, %c0_0, %c0_1] : memref<1x4x256xf32, #tpu.memory_space<vmem>>, vector<1x4x256xf32>
    %c0_2 = arith.constant 0 : index
    %c0_3 = arith.constant 0 : index
    %1 = vector.load %arg3[%c0_2, %c0_3] : memref<1x256xi32, #tpu.memory_space<vmem>>, vector<1x256xi32>
    %c0_4 = arith.constant 0 : index
    %c0_5 = arith.constant 0 : index
    %2 = vector.load %arg4[%c0_4, %c0_5] : memref<1x256xi32, #tpu.memory_space<vmem>>, vector<1x256xi32>
    %3 = tpu.iota {dimensions = array<i32: 0>} : vector<16x256xi32>
    %4 = vector.broadcast %1 : vector<1x256xi32> to vector<16x256xi32>
    %5 = arith.cmpi eq, %3, %4 : vector<16x256xi32>
    %6 = arith.extui %5 : vector<16x256xi1> to vector<16x256xi32>
    %7 = arith.sitofp %6 : vector<16x256xi32> to vector<16x256xf32>
    %8 = tpu.iota {dimensions = array<i32: 0>} : vector<16x256xi32>
    %9 = vector.broadcast %2 : vector<1x256xi32> to vector<16x256xi32>
    %10 = arith.cmpi eq, %8, %9 : vector<16x256xi32>
    %11 = arith.extui %10 : vector<16x256xi1> to vector<16x256xi32>
    %12 = arith.sitofp %11 : vector<16x256xi32> to vector<16x256xf32>
    %c0_6 = arith.constant 0 : index
    %c0_7 = arith.constant 0 : index
    %13 = vector.load %arg2[%c0_6, %c0_7] : memref<4x16xf32, #tpu.memory_space<vmem>>, vector<4x16xf32>
    %cst = arith.constant dense<0.000000e+00> : vector<4x256xf32>
    %14 = tpu.matmul %13, %7, %cst {dimension_numbers = #tpu.dot_dimension_numbers<[1], [0], [0], [1], [0, 0, 1, 1], [], []>} : vector<4x16xf32>, vector<16x256xf32>, vector<4x256xf32> -> vector<4x256xf32>
    %15 = vector.shape_cast %14 : vector<4x256xf32> to vector<1x4x256xf32>
    %16 = arith.mulf %0, %15 : vector<1x4x256xf32>
    %cst_8 = arith.constant dense<0.000000e+00> : vector<1x256xf32>
    %17 = vector.multi_reduction <add>, %16, %cst_8 [1] : vector<1x4x256xf32> to vector<1x256xf32>
    %cst_9 = arith.constant dense<0.000000e+00> : vector<1x16xf32>
    %18 = tpu.matmul %17, %12, %cst_9 {dimension_numbers = #tpu.dot_dimension_numbers<[1], [1], [0], [0], [0, 0, 1, 0], [], []>} : vector<1x256xf32>, vector<16x256xf32>, vector<1x16xf32> -> vector<1x16xf32>
    %19 = tpu.iota {dimensions = array<i32: 1>} : vector<1x16xi32>
    %cst_10 = arith.constant 0.000000e+00 : f32
    %20 = vector.broadcast %cst_10 : f32 to vector<1x16xf32>
    %c0_i32 = arith.constant 0 : i32
    %cst_11 = arith.constant dense<0xFF800000> : vector<1xf32>
    %21 = vector.multi_reduction <maximumf>, %18, %cst_11 [1] : vector<1x16xf32> to vector<1xf32>
    %22 = vector.shape_cast %21 : vector<1xf32> to vector<1x1xf32>
    %23 = vector.broadcast %22 : vector<1x1xf32> to vector<1x16xf32>
    %24 = arith.cmpf oeq, %18, %23 : vector<1x16xf32>
    %c16_i32 = arith.constant 16 : i32
    %25 = vector.broadcast %c16_i32 : i32 to vector<1x16xi32>
    %26 = arith.select %24, %19, %25 : vector<1x16xi1>, vector<1x16xi32>
    %cst_12 = arith.constant dense<2147483647> : vector<1xi32>
    %27 = vector.multi_reduction <minsi>, %26, %cst_12 [1] : vector<1x16xi32> to vector<1xi32>
    %28 = vector.shape_cast %27 : vector<1xi32> to vector<1x1xi32>
    %29 = vector.broadcast %28 : vector<1x1xi32> to vector<1x16xi32>
    %30 = arith.cmpi eq, %19, %29 : vector<1x16xi32>
    %cst_13 = arith.constant 0xFF800000 : f32
    %31 = vector.broadcast %cst_13 : f32 to vector<1x16xf32>
    %32 = arith.select %30, %31, %18 : vector<1x16xi1>, vector<1x16xf32>
    %33 = arith.extui %30 : vector<1x16xi1> to vector<1x16xi32>
    %34 = arith.sitofp %33 : vector<1x16xi32> to vector<1x16xf32>
    %35 = arith.maximumf %20, %34 : vector<1x16xf32>
    %c1_i32 = arith.constant 1 : i32
    %cst_14 = arith.constant dense<0xFF800000> : vector<1xf32>
    %36 = vector.multi_reduction <maximumf>, %32, %cst_14 [1] : vector<1x16xf32> to vector<1xf32>
    %37 = vector.shape_cast %36 : vector<1xf32> to vector<1x1xf32>
    %38 = vector.broadcast %37 : vector<1x1xf32> to vector<1x16xf32>
    %39 = arith.cmpf oeq, %32, %38 : vector<1x16xf32>
    %c16_i32_15 = arith.constant 16 : i32
    %40 = vector.broadcast %c16_i32_15 : i32 to vector<1x16xi32>
    %41 = arith.select %39, %19, %40 : vector<1x16xi1>, vector<1x16xi32>
    %cst_16 = arith.constant dense<2147483647> : vector<1xi32>
    %42 = vector.multi_reduction <minsi>, %41, %cst_16 [1] : vector<1x16xi32> to vector<1xi32>
    %43 = vector.shape_cast %42 : vector<1xi32> to vector<1x1xi32>
    %44 = vector.broadcast %43 : vector<1x1xi32> to vector<1x16xi32>
    %45 = arith.cmpi eq, %19, %44 : vector<1x16xi32>
    %cst_17 = arith.constant 0xFF800000 : f32
    %46 = vector.broadcast %cst_17 : f32 to vector<1x16xf32>
    %47 = arith.select %45, %46, %32 : vector<1x16xi1>, vector<1x16xf32>
    %48 = arith.extui %45 : vector<1x16xi1> to vector<1x16xi32>
    %49 = arith.sitofp %48 : vector<1x16xi32> to vector<1x16xf32>
    %50 = arith.maximumf %35, %49 : vector<1x16xf32>
    %c2_i32 = arith.constant 2 : i32
    %cst_18 = arith.constant dense<0xFF800000> : vector<1xf32>
    %51 = vector.multi_reduction <maximumf>, %47, %cst_18 [1] : vector<1x16xf32> to vector<1xf32>
    %52 = vector.shape_cast %51 : vector<1xf32> to vector<1x1xf32>
    %53 = vector.broadcast %52 : vector<1x1xf32> to vector<1x16xf32>
    %54 = arith.cmpf oeq, %47, %53 : vector<1x16xf32>
    %c16_i32_19 = arith.constant 16 : i32
    %55 = vector.broadcast %c16_i32_19 : i32 to vector<1x16xi32>
    %56 = arith.select %54, %19, %55 : vector<1x16xi1>, vector<1x16xi32>
    %cst_20 = arith.constant dense<2147483647> : vector<1xi32>
    %57 = vector.multi_reduction <minsi>, %56, %cst_20 [1] : vector<1x16xi32> to vector<1xi32>
    %58 = vector.shape_cast %57 : vector<1xi32> to vector<1x1xi32>
    %59 = vector.broadcast %58 : vector<1x1xi32> to vector<1x16xi32>
    %60 = arith.cmpi eq, %19, %59 : vector<1x16xi32>
    %cst_21 = arith.constant 0xFF800000 : f32
    %61 = vector.broadcast %cst_21 : f32 to vector<1x16xf32>
    %62 = arith.select %60, %61, %47 : vector<1x16xi1>, vector<1x16xf32>
    %63 = arith.extui %60 : vector<1x16xi1> to vector<1x16xi32>
    %64 = arith.sitofp %63 : vector<1x16xi32> to vector<1x16xf32>
    %65 = arith.maximumf %50, %64 : vector<1x16xf32>
    %66 = arith.mulf %18, %65 : vector<1x16xf32>
    %cst_22 = arith.constant dense<0.000000e+00> : vector<1x256xf32>
    %67 = tpu.matmul %66, %12, %cst_22 {dimension_numbers = #tpu.dot_dimension_numbers<[1], [0], [0], [1], [0, 0, 1, 1], [], []>} : vector<1x16xf32>, vector<16x256xf32>, vector<1x256xf32> -> vector<1x256xf32>
    %68 = vector.shape_cast %67 : vector<1x256xf32> to vector<1x1x256xf32>
    %69 = vector.broadcast %68 : vector<1x1x256xf32> to vector<1x4x256xf32>
    %70 = arith.mulf %0, %69 : vector<1x4x256xf32>
    %c0_23 = arith.constant 0 : index
    %c0_24 = arith.constant 0 : index
    %c0_25 = arith.constant 0 : index
    %71 = vector.load %arg5[%c0_23, %c0_24, %c0_25] : memref<1x4x256xf32, #tpu.memory_space<vmem>>, vector<1x4x256xf32>
    tpu.vector_store %arg5[%c0_23, %c0_24, %c0_25], %70 {strides = array<i32>} : memref<1x4x256xf32, #tpu.memory_space<vmem>>, vector<1x4x256xf32>,
    return
  }
  func.func @transform_0(%arg0: i32) -> (i32, i32, i32) {
    %c0_i32 = arith.constant 0 : i32
    %c0_i32_0 = arith.constant 0 : i32
    %c0_i32_1 = arith.constant 0 : i32
    return %arg0, %c0_i32, %c0_i32_0 : i32, i32, i32
  }
  func.func @transform_1(%arg0: i32) -> (i32, i32) {
    %c0_i32 = arith.constant 0 : i32
    %c0_i32_0 = arith.constant 0 : i32
    %c0_i32_1 = arith.constant 0 : i32
    return %c0_i32, %c0_i32_0 : i32, i32
  }
  func.func @transform_2(%arg0: i32) -> (i32, i32) {
    %c0_i32 = arith.constant 0 : i32
    %c0_i32_0 = arith.constant 0 : i32
    %c0_i32_1 = arith.constant 0 : i32
    return %c0_i32, %c0_i32_0 : i32, i32
  }
  func.func @transform_3(%arg0: i32) -> (i32, i32) {
    %c0_i32 = arith.constant 0 : i32
    %c0_i32_0 = arith.constant 0 : i32
    %c0_i32_1 = arith.constant 0 : i32
    return %c0_i32, %c0_i32_0 : i32, i32
  }
  func.func @transform_4(%arg0: i32) -> (i32, i32, i32) {
    %c0_i32 = arith.constant 0 : i32
    %c0_i32_0 = arith.constant 0 : i32
    %c0_i32_1 = arith.constant 0 : i32
    return %arg0, %c0_i32, %c0_i32_0 : i32, i32, i32
  }
}

</mosaic_0001>

<llo_original>
// kernel: tpu_custom_call.1
$region0: #{tpu_custom_call.1}
  #allocation0 [shape = 'u32[]', space=smem, size = 0x4, offset = 0x4, fixed_abs, tag = 'smem constant byte address 0x4 - core index']
  #allocation1 [shape = 'u32[144,128]{1,0:T(1,128)}', space=vmem, size = 0x12000, scoped, tag = 'internal scratch']
  %s0 = inlined_call_operand.hbm [shape: f32[2,4,256], index: 0, kind: input, shape index: {}]
  %s1 = inlined_call_operand.hbm [shape: f32[4,16], index: 1, kind: input, shape index: {}]
  %s2 = inlined_call_operand.vmem [shape: s32[1,256], index: 2, kind: input, shape index: {}]
  %s3 = inlined_call_operand.vmem [shape: s32[1,256], index: 3, kind: input, shape index: {}]
  %s4 = inlined_call_operand.hbm [shape: f32[2,4,256], index: 4, kind: output, shape index: {}]
  %s5 = sld [smem:[#allocation0]]
  $region57: #{tpu_custom_call.1} parent=0
    _
  %s7 = ssub.s32 1, %s5
  %s8 = scalar_select 0, %s7, %s5
  $region1: #{tpu_custom_call.1} parent=0
    #allocation2 [shape = 'u8[8192]{0}', space=vmem, size = 0x2000, scoped, tag = 'input window, operand 0']
    #allocation3 [shape = 's32[2]{0}', space=sflag, size = 0x8, scoped, tag = 'scoped memory for tpu_custom_call.1']
    #allocation4 [shape = 's32[2]{0}', space=sflag, size = 0x8, scoped, tag = 'scoped memory for tpu_custom_call.1']
    #allocation5 [shape = 'u8[2048]{0}', space=vmem, size = 0x800, scoped, tag = 'input window, operand 1, single buffered']
    #allocation6 [shape = 's32[1]{0}', space=sflag, size = 0x4, scoped, tag = 'scoped memory for tpu_custom_call.1']
    #allocation7 [shape = 'u8[8192]{0}', space=vmem, size = 0x2000, scoped, tag = 'output window, operand 0']
    %9 = vsyncpa [#allocation3], 0
    %s10 = scalar_lea.sflag [#allocation3], 1
    %11 = vsyncpa %s10, 0
    %12 = vsyncpa [#allocation6], 0
    %13 = vsyncpa [#allocation4], 0
    %s14 = scalar_lea.sflag [#allocation4], 1
    %15 = vsyncpa %s14, 0
    loop: start=0, step=1, limit=4
    $region2: #{tpu_custom_call.1} parent=1 // loop_pre_header
      _
    $region3: #{tpu_custom_call.1} parent=1 // loop_header
      %s17 = sphi 0, %s21
      %p18 = scmp.ge.s32.totalorder %s17, 4
      %s27 = sphi 0, %s29
      %s30 = sphi 0, %s27
      %s31 = sphi 0, %s30
      %s47 = sphi 0, %s31
      %s51 = sphi 0, %s51
      %s53 = sphi 0, %s51
      %s54 = sphi 0, %s53
      %s68 = sphi 0, %s54
      %s72 = sphi 0, %s72
      %s74 = sphi 0, %s72
      %s75 = sphi 0, %s74
      %s89 = sphi 0, %s75
      %s93 = sphi 0, %s93
      %s95 = sphi 0, %s93
      %s96 = sphi 0, %s95
      %s110 = sphi 0, %s96
      %s116 = sphi 0, %s118
      %s119 = sphi 0, %s116
      %s120 = sphi 0, %s119
      %s136 = sphi 0, %s120
    $region4: #{tpu_custom_call.1} parent=1 // loop_header_branch
      %20 = sbr.rel (%p18) target = $region8
    $region5: #{tpu_custom_call.1} parent=1 // loop_body
      %s22 = ssub.s32 %s17, 1
      %s23 = ssub.s32 %s17, 2
      %s24 = sadd.s32 %s17, 1
      %s25 = ssub.s32 %s17, %s24
      %p26 = scmp.eq.s32.totalorder %s25, 0
      %s28 = sadd.s32 %s27, 1
      %s29 = scalar_select %p26, %s27, %s28
      %p32 = pneg %p26
      %p33 = scmp.eq.s32.totalorder %s17, 1
      %p34 = por %p32, %p33
      %p35 = scmp.ne.s32.totalorder %s27, %s30
      %p36 = scmp.eq.s32.totalorder %s17, 0
      %p37 = por %p35, %p36
      %p38 = scmp.ne.s32.totalorder %s27, %s30
      %p39 = scmp.eq.s32.totalorder %s22, 1
      %p40 = por %p38, %p39
      %p41 = scmp.ne.s32.totalorder %s30, %s31
      %p42 = scmp.eq.s32.totalorder %s22, 0
      %p43 = por %p41, %p42
      %p44 = scmp.ne.s32.totalorder %s30, %s31
      %p45 = scmp.eq.s32.totalorder %s23, 1
      %p46 = por %p44, %p45
      %p48 = scmp.ne.s32.totalorder %s31, %s47
      %p49 = scmp.eq.s32.totalorder %s23, 0
      %p50 = por %p48, %p49
      %s52 = sadd.s32 %s51, 1
      %p55 = scmp.eq.s32.totalorder %s17, 1
      %p56 = scmp.ne.s32.totalorder %s51, %s53
      %p57 = scmp.eq.s32.totalorder %s17, 0
      %p58 = por %p56, %p57
      %p59 = scmp.ne.s32.totalorder %s51, %s53
      %p60 = scmp.eq.s32.totalorder %s22, 1
      %p61 = por %p59, %p60
      %p62 = scmp.ne.s32.totalorder %s53, %s54
      %p63 = scmp.eq.s32.totalorder %s22, 0
      %p64 = por %p62, %p63
      %p65 = scmp.ne.s32.totalorder %s53, %s54
      %p66 = scmp.eq.s32.totalorder %s23, 1
      %p67 = por %p65, %p66
      %p69 = scmp.ne.s32.totalorder %s54, %s68
      %p70 = scmp.eq.s32.totalorder %s23, 0
      %p71 = por %p69, %p70
      %s73 = sadd.s32 %s72, 1
      %p76 = scmp.eq.s32.totalorder %s17, 1
      %p77 = scmp.ne.s32.totalorder %s72, %s74
      %p78 = scmp.eq.s32.totalorder %s17, 0
      %p79 = por %p77, %p78
      %p80 = scmp.ne.s32.totalorder %s72, %s74
      %p81 = scmp.eq.s32.totalorder %s22, 1
      %p82 = por %p80, %p81
      %p83 = scmp.ne.s32.totalorder %s74, %s75
      %p84 = scmp.eq.s32.totalorder %s22, 0
      %p85 = por %p83, %p84
      %p86 = scmp.ne.s32.totalorder %s74, %s75
      %p87 = scmp.eq.s32.totalorder %s23, 1
      %p88 = por %p86, %p87
      %p90 = scmp.ne.s32.totalorder %s75, %s89
      %p91 = scmp.eq.s32.totalorder %s23, 0
      %p92 = por %p90, %p91
      %s94 = sadd.s32 %s93, 1
      %p97 = scmp.eq.s32.totalorder %s17, 1
      %p98 = scmp.ne.s32.totalorder %s93, %s95
      %p99 = scmp.eq.s32.totalorder %s17, 0
      %p100 = por %p98, %p99
      %p101 = scmp.ne.s32.totalorder %s93, %s95
      %p102 = scmp.eq.s32.totalorder %s22, 1
      %p103 = por %p101, %p102
      %p104 = scmp.ne.s32.totalorder %s95, %s96
      %p105 = scmp.eq.s32.totalorder %s22, 0
      %p106 = por %p104, %p105
      %p107 = scmp.ne.s32.totalorder %s95, %s96
      %p108 = scmp.eq.s32.totalorder %s23, 1
      %p109 = por %p107, %p108
      %p111 = scmp.ne.s32.totalorder %s96, %s110
      %p112 = scmp.eq.s32.totalorder %s23, 0
      %p113 = por %p111, %p112
      %s114 = ssub.s32 %s17, %s24
      %p115 = scmp.eq.s32.totalorder %s114, 0
      %s117 = sadd.s32 %s116, 1
      %s118 = scalar_select %p115, %s116, %s117
      %p121 = pneg %p115
      %p122 = scmp.eq.s32.totalorder %s17, 1
      %p123 = por %p121, %p122
      %p124 = scmp.ne.s32.totalorder %s116, %s119
      %p125 = scmp.eq.s32.totalorder %s17, 0
      %p126 = por %p124, %p125
      %p127 = scmp.ne.s32.totalorder %s116, %s119
      %p128 = scmp.eq.s32.totalorder %s22, 1
      %p129 = por %p127, %p128
      %p130 = scmp.ne.s32.totalorder %s119, %s120
      %p131 = scmp.eq.s32.totalorder %s22, 0
      %p132 = por %p130, %p131
      %p133 = scmp.ne.s32.totalorder %s119, %s120
      %p134 = scmp.eq.s32.totalorder %s23, 1
      %p135 = por %p133, %p134
      %p137 = scmp.ne.s32.totalorder %s120, %s136
      %p138 = scmp.eq.s32.totalorder %s23, 0
      %p139 = por %p137, %p138
      %p140 = scmp.le.s32.totalorder 1, %s17
      %p141 = scmp.lt.s32.totalorder %s17, 3
      %p142 = pnand %p140, %p141
      %p143 = pneg %p142
      // Predicated region
      $region9: #{tpu_custom_call.1} parent=5 // pred_check
        _
      $region10: #{tpu_custom_call.1} parent=5 // pred_check_branch
        %145 = sbr.rel (%p142) target = $region12
      $region11: #{tpu_custom_call.1} parent=5 // pred_region
        %s146 = ssub.s32 %s17, 1
        // Predicated region
        $region13: #{tpu_custom_call.1} parent=11 // pred_check
          %p147 = pneg %p64
        $region14: #{tpu_custom_call.1} parent=11 // pred_check_branch
          %149 = sbr.rel (%p147) target = $region16
        $region15: #{tpu_custom_call.1} parent=11 // pred_region
          %s151 = ssub.s32 64, 64
          %152 = vsyncadd [#allocation6], %s151
          %s154 = sshll.u32 [#allocation5], 4
          %s155 = int_to_ptr.vmem [resolvable:$true] %s154
          %157 = dma.hbm_to_vmem [thread:$0]  %s1, 64, %s155, [#allocation6]
        $region16: #{tpu_custom_call.1} parent=11 // pred_fallthru
          _
        // Predicated region
        $region17: #{tpu_custom_call.1} parent=11 // pred_check
          %p158 = pneg %p85
        $region18: #{tpu_custom_call.1} parent=11 // pred_check_branch
          %160 = sbr.rel (%p158) target = $region20
        $region19: #{tpu_custom_call.1} parent=11 // pred_region
          _
        $region20: #{tpu_custom_call.1} parent=11 // pred_fallthru
          _
        // Predicated region
        $region21: #{tpu_custom_call.1} parent=11 // pred_check
          %p161 = pneg %p106
        $region22: #{tpu_custom_call.1} parent=11 // pred_check_branch
          %163 = sbr.rel (%p161) target = $region24
        $region23: #{tpu_custom_call.1} parent=11 // pred_region
          _
        $region24: #{tpu_custom_call.1} parent=11 // pred_fallthru
          _
      $region12: #{tpu_custom_call.1} parent=5 // pred_fallthru
        _
      %p164 = scmp.lt.s32.totalorder %s17, 2
      // Predicated region
      $region25: #{tpu_custom_call.1} parent=5 // pred_check
        %p165 = pneg %p164
      $region26: #{tpu_custom_call.1} parent=5 // pred_check_branch
        %167 = sbr.rel (%p165) target = $region28
      $region27: #{tpu_custom_call.1} parent=5 // pred_region
        // Predicated region
        $region29: #{tpu_custom_call.1} parent=27 // pred_check
          %p168 = pneg %p37
        $region30: #{tpu_custom_call.1} parent=27 // pred_check_branch
          %170 = sbr.rel (%p168) target = $region32
        $region31: #{tpu_custom_call.1} parent=27 // pred_region
          %s171 = sand.u32 %s27, 1
          %s172 = scalar_lea.sflag [#allocation3], %s171
          %s173 = sand.u32 %s27, 1
          %s174 = smul.addr %s173, 8
          %s175 = scalar_lea.vmem [#allocation2], %s174
          %s177 = ssub.s32 128, 128
          %178 = vsyncadd %s172, %s177
          %s179 = smul.addr %s17, 2
          %s180 = smul.addr %s179, 64
          %s181 = scalar_lea.hbm %s0, %s180
          %s183 = sshll.u32 %s175, 4
          %s184 = int_to_ptr.vmem [resolvable:$true] %s183
          %186 = dma.hbm_to_vmem [thread:$0]  %s181, 128, %s184, %s172
        $region32: #{tpu_custom_call.1} parent=27 // pred_fallthru
          _
      $region28: #{tpu_custom_call.1} parent=5 // pred_fallthru
        _
      %p187 = scmp.le.s32.totalorder 1, %s17
      %p188 = scmp.lt.s32.totalorder %s17, 3
      %p189 = pnand %p187, %p188
      %p190 = pneg %p189
      // Predicated region
      $region33: #{tpu_custom_call.1} parent=5 // pred_check
        _
      $region34: #{tpu_custom_call.1} parent=5 // pred_check_branch
        %192 = sbr.rel (%p189) target = $region36
      $region35: #{tpu_custom_call.1} parent=5 // pred_region
        %s193 = ssub.s32 %s17, 1
        %s194 = sand.u32 %s30, 1
        %s195 = scalar_lea.sflag [#allocation3], %s194
        %s196 = sand.u32 %s30, 1
        %s197 = smul.addr %s196, 8
        %s198 = scalar_lea.vmem [#allocation2], %s197
        // Predicated region
        $region37: #{tpu_custom_call.1} parent=35 // pred_check
          %p199 = pneg %p43
        $region38: #{tpu_custom_call.1} parent=35 // pred_check_branch
          %201 = sbr.rel (%p199) target = $region40
        $region39: #{tpu_custom_call.1} parent=35 // pred_region
          %202 = dma.done %s195, 128
        $region40: #{tpu_custom_call.1} parent=35 // pred_fallthru
          _
        // Predicated region
        $region41: #{tpu_custom_call.1} parent=35 // pred_check
          %p203 = pneg %p64
        $region42: #{tpu_custom_call.1} parent=35 // pred_check_branch
          %205 = sbr.rel (%p203) target = $region44
        $region43: #{tpu_custom_call.1} parent=35 // pred_region
          %206 = dma.done [#allocation6], 64
        $region44: #{tpu_custom_call.1} parent=35 // pred_fallthru
          _
        %s207 = sand.u32 %s30, 1
        %s208 = scalar_lea.sflag [#allocation3], %s207
        %s209 = sand.u32 %s30, 1
        %s210 = smul.addr %s209, 8
        %s211 = scalar_lea.vmem [#allocation2], %s210
        %p212 = pneg %p43
        %p213 = pneg %p40
        %p214 = pneg %p64
        %p215 = pneg %p61
        %p216 = pneg %p85
        %p217 = pneg %p82
        %p218 = pneg %p106
        %p219 = pneg %p103
        %p220 = pneg %p132
        %p221 = pneg %p129
        %s222 = sand.u32 %s119, 1
        %s223 = scalar_lea.sflag [#allocation4], %s222
        %s224 = sand.u32 %s119, 1
        %s225 = smul.addr %s224, 8
        %s226 = scalar_lea.vmem [#allocation7], %s225
        %v227 = vld [vmem:[%s198] sm:$0xff]
        %v228 = vld [vmem:[%s2] sm:$0x3]
        %v229 = vld [vmem:[%s3] sm:$0x3]
        %v230 = vlaneseq
        %v231 = vshrl.u32 %v230, 7
        %v232 = vadd.s32 %v231, 8
        %v233 = vlaneseq
        %v234 = vshrl.u32 %v233, 7
        %v235 = vsub.s32 0, %v234
        %v236 = vrot.slane %v228, %v235
        %v237 = vlaneseq
        %v238 = vshrl.u32 %v237, 7
        %v239 = vsub.s32 1, %v238
        %v240 = vrot.slane %v228, %v239
        %vm241 = vcmp.eq.s32.totalorder %v231, %v236
        %vm242 = vcmp.eq.s32.totalorder %v231, %v240
        %vm243 = vcmp.eq.s32.totalorder %v232, %v236
        %vm244 = vcmp.eq.s32.totalorder %v232, %v240
        %v245 = vsel %vm241, 1, 0
        %v246 = vsel %vm242, 1, 0
        %v247 = vsel %vm243, 1, 0
        %v248 = vsel %vm244, 1, 0
        %v249 = vcvt.s32.f32 %v245
        %v250 = vcvt.s32.f32 %v246
        %v251 = vcvt.s32.f32 %v247
        %v252 = vcvt.s32.f32 %v248
        %v253 = vlaneseq
        %v254 = vshrl.u32 %v253, 7
        %v255 = vsub.s32 0, %v254
        %v256 = vrot.slane %v229, %v255
        %v257 = vlaneseq
        %v258 = vshrl.u32 %v257, 7
        %v259 = vsub.s32 1, %v258
        %v260 = vrot.slane %v229, %v259
        %vm261 = vcmp.eq.s32.totalorder %v231, %v256
        %vm262 = vcmp.eq.s32.totalorder %v231, %v260
        %vm263 = vcmp.eq.s32.totalorder %v232, %v256
        %vm264 = vcmp.eq.s32.totalorder %v232, %v260
        %v265 = vsel %vm261, 1, 0
        %v266 = vsel %vm262, 1, 0
        %v267 = vsel %vm263, 1, 0
        %v268 = vsel %vm264, 1, 0
        %v269 = vcvt.s32.f32 %v265
        %v270 = vcvt.s32.f32 %v266
        %v271 = vcvt.s32.f32 %v267
        %v272 = vcvt.s32.f32 %v268
        %v273 = vld [vmem:[#allocation5] sm:$0xf]
        %vm274 = vcmask 130048
        %v276 = vsel %vm274, %v273, 0
        %278 = vmatprep.subr.mxu0 %v250
        %279 = vmatpush1.msra.mxu0 %v249
        %280 = vmatprep.subr.mxu0 %v252
        %281 = vmatpush1.msra.mxu0 %v251
        %282 = vmatprep.subr.mxu0 0.0
        %283 = vmatpush1.msra.mxu0 0.0
        %284 = vmatprep.subr.mxu0 0.0
        %285 = vmatpush1.msra.mxu0 0.0
        %286 = vmatprep.subr.mxu0 0.0
        %287 = vmatpush1.msra.mxu0 0.0
        %288 = vmatprep.subr.mxu0 0.0
        %289 = vmatpush1.msra.mxu0 0.0
        %290 = vmatprep.subr.mxu0 0.0
        %291 = vmatpush1.msra.mxu0 0.0
        %292 = vmatprep.subr.mxu0 0.0
        %293 = vmatpush1.msra.mxu0 0.0
        %294 = vmatprep.subr.mxu0 0.0
        %295 = vmatpush1.msra.mxu0 0.0
        %296 = vmatprep.subr.mxu0 0.0
        %297 = vmatpush1.msra.mxu0 0.0
        %298 = vmatprep.subr.mxu0 0.0
        %299 = vmatpush1.msra.mxu0 0.0
        %300 = vmatprep.subr.mxu0 0.0
        %301 = vmatpush1.msra.mxu0 0.0
        %302 = vmatprep.subr.mxu0 0.0
        %303 = vmatpush1.msra.mxu0 0.0
        %304 = vmatprep.subr.mxu0 0.0
        %305 = vmatpush1.msra.mxu0 0.0
        %306 = vmatprep.subr.mxu0 0.0
        %307 = vmatpush1.msra.mxu0 0.0
        %308 = vmatprep.subr.mxu0 0.0
        %309 = vmatpush1.msra.mxu0 0.0
        %310 = vmatprep.subr.mxu0 0.0
        %311 = vmatpush1.msra.mxu0 0.0
        %312 = vmatprep.subr.mxu0 0.0
        %313 = vmatpush1.msra.mxu0 0.0
        %314 = vmatprep.subr.mxu0 0.0
        %315 = vmatpush1.msra.mxu0 0.0
        %316 = vmatprep.subr.mxu0 0.0
        %317 = vmatpush1.msra.mxu0 0.0
        %318 = vmatprep.subr.mxu0 0.0
        %319 = vmatpush1.msra.mxu0 0.0
        %320 = vmatprep.subr.mxu0 0.0
        %321 = vmatpush1.msra.mxu0 0.0
        %322 = vmatprep.subr.mxu0 0.0
        %323 = vmatpush1.msra.mxu0 0.0
        %324 = vmatprep.subr.mxu0 0.0
        %325 = vmatpush1.msra.mxu0 0.0
        %326 = vmatprep.subr.mxu0 0.0
        %327 = vmatpush1.msra.mxu0 0.0
        %328 = vmatprep.subr.mxu0 0.0
        %329 = vmatpush1.msra.mxu0 0.0
        %330 = vmatprep.subr.mxu0 0.0
        %331 = vmatpush1.msra.mxu0 0.0
        %332 = vmatprep.subr.mxu0 0.0
        %333 = vmatpush1.msra.mxu0 0.0
        %334 = vmatprep.subr.mxu0 0.0
        %335 = vmatpush1.msra.mxu0 0.0
        %336 = vmatprep.subr.mxu0 0.0
        %337 = vmatpush1.msra.mxu0 0.0
        %338 = vmatprep.subr.mxu0 0.0
        %339 = vmatpush1.msra.mxu0 0.0
        %340 = vmatprep.subr.mxu0 0.0
        %341 = vmatpush1.msra.mxu0 0.0
        %342 = vmatprep.mubr.f32.mxu0 0.0
        %343 = vmatmul.mubr.f32.gmra.mrb[0].mxu0 %v276
        %v344 = vpop.f32.mrb[0].mxu0
        %v345 = vadd.f32 0.0, %v344
        %v346 = vpop.f32.mrb[0].mxu0
        %v347 = vadd.f32 0.0, %v346
        %348 = vdwg.mxu0
        %v351 = vcombine.low %v345, %v347
        %v353 = vmul.f32 %v227, %v351
        %v355 = vcombine.high %v353, %v353
        %vm357 = vcmask 1043456
        %v358 = vsel %vm357, %v353, 0.0
        %v359 = vrot.slane %v358, 4
        %v360 = vadd.f32 %v358, %v359
        %v361 = vrot.slane %v360, 2
        %v362 = vadd.f32 %v360, %v361
        %v363 = vrot.slane %v362, 1
        %v364 = vadd.f32 %v362, %v363
        %v365 = vsel %vm357, %v355, 0.0
        %v366 = vrot.slane %v365, 4
        %v367 = vadd.f32 %v365, %v366
        %v368 = vrot.slane %v367, 2
        %v369 = vadd.f32 %v367, %v368
        %v370 = vrot.slane %v369, 1
        %v371 = vadd.f32 %v369, %v370
        %372 = vmatprep.subr.mxu0 %v270
        %373 = vmatpush1.xpose.msra.mxu0 %v269
        %374 = vmatprep.subr.mxu0 %v272
        %375 = vmatpush1.xpose.msra.mxu0 %v271
        %376 = vmatprep.subr.mxu0 0.0
        %377 = vmatpush1.xpose.msra.mxu0 0.0
        %378 = vmatprep.subr.mxu0 0.0
        %379 = vmatpush1.xpose.msra.mxu0 0.0
        %380 = vmatprep.subr.mxu0 0.0
        %381 = vmatpush1.xpose.msra.mxu0 0.0
        %382 = vmatprep.subr.mxu0 0.0
        %383 = vmatpush1.xpose.msra.mxu0 0.0
        %384 = vmatprep.subr.mxu0 0.0
        %385 = vmatpush1.xpose.msra.mxu0 0.0
        %386 = vmatprep.subr.mxu0 0.0
        %387 = vmatpush1.xpose.msra.mxu0 0.0
        %388 = vmatprep.subr.mxu0 0.0
        %389 = vmatpush1.xpose.msra.mxu0 0.0
        %390 = vmatprep.subr.mxu0 0.0
        %391 = vmatpush1.xpose.msra.mxu0 0.0
        %392 = vmatprep.subr.mxu0 0.0
        %393 = vmatpush1.xpose.msra.mxu0 0.0
        %394 = vmatprep.subr.mxu0 0.0
        %395 = vmatpush1.xpose.msra.mxu0 0.0
        %396 = vmatprep.subr.mxu0 0.0
        %397 = vmatpush1.xpose.msra.mxu0 0.0
        %398 = vmatprep.subr.mxu0 0.0
        %399 = vmatpush1.xpose.msra.mxu0 0.0
        %400 = vmatprep.subr.mxu0 0.0
        %401 = vmatpush1.xpose.msra.mxu0 0.0
        %402 = vmatprep.subr.mxu0 0.0
        %403 = vmatpush1.xpose.msra.mxu0 0.0
        %404 = vmatprep.subr.mxu0 0.0
        %405 = vmatpush1.xpose.msra.mxu0 0.0
        %406 = vmatprep.subr.mxu0 0.0
        %407 = vmatpush1.xpose.msra.mxu0 0.0
        %408 = vmatprep.subr.mxu0 0.0
        %409 = vmatpush1.xpose.msra.mxu0 0.0
        %410 = vmatprep.subr.mxu0 0.0
        %411 = vmatpush1.xpose.msra.mxu0 0.0
        %412 = vmatprep.subr.mxu0 0.0
        %413 = vmatpush1.xpose.msra.mxu0 0.0
        %414 = vmatprep.subr.mxu0 0.0
        %415 = vmatpush1.xpose.msra.mxu0 0.0
        %416 = vmatprep.subr.mxu0 0.0
        %417 = vmatpush1.xpose.msra.mxu0 0.0
        %418 = vmatprep.subr.mxu0 0.0
        %419 = vmatpush1.xpose.msra.mxu0 0.0
        %420 = vmatprep.subr.mxu0 0.0
        %421 = vmatpush1.xpose.msra.mxu0 0.0
        %422 = vmatprep.subr.mxu0 0.0
        %423 = vmatpush1.xpose.msra.mxu0 0.0
        %424 = vmatprep.subr.mxu0 0.0
        %425 = vmatpush1.xpose.msra.mxu0 0.0
        %426 = vmatprep.subr.mxu0 0.0
        %427 = vmatpush1.xpose.msra.mxu0 0.0
        %428 = vmatprep.subr.mxu0 0.0
        %429 = vmatpush1.xpose.msra.mxu0 0.0
        %430 = vmatprep.subr.mxu0 0.0
        %431 = vmatpush1.xpose.msra.mxu0 0.0
        %432 = vmatprep.subr.mxu0 0.0
        %433 = vmatpush1.xpose.msra.mxu0 0.0
        %434 = vmatprep.subr.mxu0 0.0
        %435 = vmatpush1.xpose.msra.mxu0 0.0
        %436 = vmatprep.mubr.f32.mxu0 %v371
        %437 = vmatmul.mubr.f32.gmra.mrb[0].mxu0 %v364
        %v438 = vpop.f32.mrb[0].mxu0
        %v439 = vadd.f32 0.0, %v438
        %v440 = vpop.f32.mrb[0].mxu0
        %441 = vdwg.mxu0
        %v442 = vlaneseq
        %v443 = vand.u32 %v442, 127
        %vm444 = vcmask 122880
        %v445 = vsel %vm444, %v439, -inf
        %446 = vmax.xlane.f32.xlu0 %v445
        %v447 = vpop.xlane.xlu0 %446
        %vm448 = vcmp.eq.f32.partialorder %v439, %v447
        %v449 = vsel %vm448, %v443, 16
        %v450 = vsel %vm444, %v449, 2147483647
        %v451 = vand.u32 %v450, 65535
        %v452 = vshra.s32 %v450, 16
        %v453 = vcvt.s32.f32 %v451
        %v454 = vcvt.s32.f32 %v452
        %455 = vmin.xlane.f32.xlu0 %v454
        %v456 = vpop.xlane.xlu0 %455
        %vm457 = vcmp.eq.f32.partialorder %v454, %v456
        %v458 = vsel %vm457, %v453, inf
        %459 = vmin.xlane.f32.xlu0 %v458
        %v460 = vpop.xlane.xlu0 %459
        %v461 = vcvt.f32.s32 %v460
        %v462 = vcvt.f32.s32 %v456
        %v463 = vshll.u32 %v462, 16
        %v464 = vadd.s32 %v463, %v461
        %vm465 = vcmp.eq.s32.totalorder %v443, %v464
        %v466 = vsel %vm465, -inf, %v439
        %v467 = vsel %vm465, 1, 0
        %v468 = vcvt.s32.f32 %v467
        %v469 = vmax.f32 %v468, 0.0
        %v470 = vsel %vm444, %v466, -inf
        %471 = vmax.xlane.f32.xlu0 %v470
        %v472 = vpop.xlane.xlu0 %471
        %vm473 = vcmp.eq.f32.partialorder %v466, %v472
        %v474 = vsel %vm473, %v443, 16
        %v475 = vsel %vm444, %v474, 2147483647
        %v476 = vand.u32 %v475, 65535
        %v477 = vshra.s32 %v475, 16
        %v478 = vcvt.s32.f32 %v476
        %v479 = vcvt.s32.f32 %v477
        %480 = vmin.xlane.f32.xlu0 %v479
        %v481 = vpop.xlane.xlu0 %480
        %vm482 = vcmp.eq.f32.partialorder %v479, %v481
        %v483 = vsel %vm482, %v478, inf
        %484 = vmin.xlane.f32.xlu0 %v483
        %v485 = vpop.xlane.xlu0 %484
        %v486 = vcvt.f32.s32 %v485
        %v487 = vcvt.f32.s32 %v481
        %v488 = vshll.u32 %v487, 16
        %v489 = vadd.s32 %v488, %v486
        %vm490 = vcmp.eq.s32.totalorder %v443, %v489
        %v491 = vsel %vm490, -inf, %v466
        %v492 = vsel %vm490, 1, 0
        %v493 = vcvt.s32.f32 %v492
        %v494 = vmax.f32 %v469, %v493
        %v495 = vsel %vm444, %v491, -inf
        %496 = vmax.xlane.f32.xlu0 %v495
        %v497 = vpop.xlane.xlu0 %496
        %vm498 = vcmp.eq.f32.partialorder %v491, %v497
        %v499 = vsel %vm498, %v443, 16
        %v500 = vsel %vm444, %v499, 2147483647
        %v501 = vand.u32 %v500, 65535
        %v502 = vshra.s32 %v500, 16
        %v503 = vcvt.s32.f32 %v501
        %v504 = vcvt.s32.f32 %v502
        %505 = vmin.xlane.f32.xlu0 %v504
        %v506 = vpop.xlane.xlu0 %505
        %vm507 = vcmp.eq.f32.partialorder %v504, %v506
        %v508 = vsel %vm507, %v503, inf
        %509 = vmin.xlane.f32.xlu0 %v508
        %v510 = vpop.xlane.xlu0 %509
        %v511 = vcvt.f32.s32 %v510
        %v512 = vcvt.f32.s32 %v506
        %v513 = vshll.u32 %v512, 16
        %v514 = vadd.s32 %v513, %v511
        %vm515 = vcmp.eq.s32.totalorder %v443, %v514
        %v516 = vsel %vm515, 1, 0
        %v517 = vcvt.s32.f32 %v516
        %v518 = vmax.f32 %v494, %v517
        %v519 = vmul.f32 %v439, %v518
        %v521 = vsel %vm274, %v519, 0
        %523 = vmatprep.subr.mxu0 %v270
        %524 = vmatpush1.msra.mxu0 %v269
        %525 = vmatprep.subr.mxu0 %v272
        %526 = vmatpush1.msra.mxu0 %v271
        %527 = vmatprep.subr.mxu0 0.0
        %528 = vmatpush1.msra.mxu0 0.0
        %529 = vmatprep.subr.mxu0 0.0
        %530 = vmatpush1.msra.mxu0 0.0
        %531 = vmatprep.subr.mxu0 0.0
        %532 = vmatpush1.msra.mxu0 0.0
        %533 = vmatprep.subr.mxu0 0.0
        %534 = vmatpush1.msra.mxu0 0.0
        %535 = vmatprep.subr.mxu0 0.0
        %536 = vmatpush1.msra.mxu0 0.0
        %537 = vmatprep.subr.mxu0 0.0
        %538 = vmatpush1.msra.mxu0 0.0
        %539 = vmatprep.subr.mxu0 0.0
        %540 = vmatpush1.msra.mxu0 0.0
        %541 = vmatprep.subr.mxu0 0.0
        %542 = vmatpush1.msra.mxu0 0.0
        %543 = vmatprep.subr.mxu0 0.0
        %544 = vmatpush1.msra.mxu0 0.0
        %545 = vmatprep.subr.mxu0 0.0
        %546 = vmatpush1.msra.mxu0 0.0
        %547 = vmatprep.subr.mxu0 0.0
        %548 = vmatpush1.msra.mxu0 0.0
        %549 = vmatprep.subr.mxu0 0.0
        %550 = vmatpush1.msra.mxu0 0.0
        %551 = vmatprep.subr.mxu0 0.0
        %552 = vmatpush1.msra.mxu0 0.0
        %553 = vmatprep.subr.mxu0 0.0
        %554 = vmatpush1.msra.mxu0 0.0
        %555 = vmatprep.subr.mxu0 0.0
        %556 = vmatpush1.msra.mxu0 0.0
        %557 = vmatprep.subr.mxu0 0.0
        %558 = vmatpush1.msra.mxu0 0.0
        %559 = vmatprep.subr.mxu0 0.0
        %560 = vmatpush1.msra.mxu0 0.0
        %561 = vmatprep.subr.mxu0 0.0
        %562 = vmatpush1.msra.mxu0 0.0
        %563 = vmatprep.subr.mxu0 0.0
        %564 = vmatpush1.msra.mxu0 0.0
        %565 = vmatprep.subr.mxu0 0.0
        %566 = vmatpush1.msra.mxu0 0.0
        %567 = vmatprep.subr.mxu0 0.0
        %568 = vmatpush1.msra.mxu0 0.0
        %569 = vmatprep.subr.mxu0 0.0
        %570 = vmatpush1.msra.mxu0 0.0
        %571 = vmatprep.subr.mxu0 0.0
        %572 = vmatpush1.msra.mxu0 0.0
        %573 = vmatprep.subr.mxu0 0.0
        %574 = vmatpush1.msra.mxu0 0.0
        %575 = vmatprep.subr.mxu0 0.0
        %576 = vmatpush1.msra.mxu0 0.0
        %577 = vmatprep.subr.mxu0 0.0
        %578 = vmatpush1.msra.mxu0 0.0
        %579 = vmatprep.subr.mxu0 0.0
        %580 = vmatpush1.msra.mxu0 0.0
        %581 = vmatprep.subr.mxu0 0.0
        %582 = vmatpush1.msra.mxu0 0.0
        %583 = vmatprep.subr.mxu0 0.0
        %584 = vmatpush1.msra.mxu0 0.0
        %585 = vmatprep.subr.mxu0 0.0
        %586 = vmatpush1.msra.mxu0 0.0
        %587 = vmatprep.mubr.f32.mxu0 0.0
        %588 = vmatmul.mubr.f32.gmra.mrb[0].mxu0 %v521
        %v589 = vpop.f32.mrb[0].mxu0
        %v590 = vadd.f32 0.0, %v589
        %v591 = vpop.f32.mrb[0].mxu0
        %v592 = vadd.f32 0.0, %v591
        %593 = vdwg.mxu0
        %v594 = vlaneseq
        %v595 = vshrl.u32 %v594, 7
        %v596 = vsub.s32 0, %v595
        %v597 = vrot.slane %v590, %v596
        %v598 = vlaneseq
        %v599 = vshrl.u32 %v598, 7
        %v600 = vsub.s32 0, %v599
        %v601 = vrot.slane %v592, %v600
        %v604 = vcombine.low %v597, %v601
        %v606 = vmul.f32 %v227, %v604
        %607 = vst [vmem:[%s226] sm:$0xff] %v606
        %s608 = sand.u32 %s119, 1
        %s609 = scalar_lea.sflag [#allocation4], %s608
        %s610 = sand.u32 %s119, 1
        %s611 = smul.addr %s610, 8
        %s612 = scalar_lea.vmem [#allocation7], %s611
        // Predicated region
        $region45: #{tpu_custom_call.1} parent=35 // pred_check
          %p613 = pneg %p129
        $region46: #{tpu_custom_call.1} parent=35 // pred_check_branch
          %615 = sbr.rel (%p613) target = $region48
        $region47: #{tpu_custom_call.1} parent=35 // pred_region
          %s617 = ssub.s32 128, 128
          %618 = vsyncadd %s609, %s617
          %s619 = smul.addr %s22, 2
          %s620 = smul.addr %s619, 64
          %s621 = scalar_lea.hbm %s4, %s620
          %s623 = sshll.u32 %s612, 4
          %s624 = int_to_ptr.vmem [resolvable:$true] %s623
          %626 = dma.vmem_to_hbm [thread:$0]  %s624, 128, %s621, %s609
        $region48: #{tpu_custom_call.1} parent=35 // pred_fallthru
          _
      $region36: #{tpu_custom_call.1} parent=5 // pred_fallthru
        _
      %p627 = scmp.le.s32.totalorder 2, %s17
      // Predicated region
      $region49: #{tpu_custom_call.1} parent=5 // pred_check
        %p628 = pneg %p627
      $region50: #{tpu_custom_call.1} parent=5 // pred_check_branch
        %630 = sbr.rel (%p628) target = $region52
      $region51: #{tpu_custom_call.1} parent=5 // pred_region
        %s631 = ssub.s32 %s17, 2
        // Predicated region
        $region53: #{tpu_custom_call.1} parent=51 // pred_check
          %p632 = pneg %p135
        $region54: #{tpu_custom_call.1} parent=51 // pred_check_branch
          %634 = sbr.rel (%p632) target = $region56
        $region55: #{tpu_custom_call.1} parent=51 // pred_region
          %s635 = sand.u32 %s120, 1
          %s636 = scalar_lea.sflag [#allocation4], %s635
          %s637 = sand.u32 %s120, 1
          %s638 = smul.addr %s637, 8
          %s639 = scalar_lea.vmem [#allocation7], %s638
          %640 = dma.done %s636, 128
        $region56: #{tpu_custom_call.1} parent=51 // pred_fallthru
          _
      $region52: #{tpu_custom_call.1} parent=5 // pred_fallthru
        _
    $region6: #{tpu_custom_call.1} parent=1 // loop_footer
      %s21 = sadd.s32 1, %s17
    $region7: #{tpu_custom_call.1} parent=1 // loop_footer_branch
      %16 = sbr.rel target = $region3
    $region8: #{tpu_custom_call.1} parent=1 // loop_exit
      _
    %641 = vsyncpa [#allocation3], 1
    %s642 = scalar_lea.sflag [#allocation3], 1
    %643 = vsyncpa %s642, 1
    %644 = vsyncpa [#allocation6], 1
    %645 = vsyncpa [#allocation4], 1
    %s646 = scalar_lea.sflag [#allocation4], 1
    %647 = vsyncpa %s646, 1

</llo_original>
